<compile_context>
chip_gen: v5e
topology: v5e:2x2
jax: 0.10.0
libtpu: 0.0.40
codegen_flags: <defaults>
</compile_context>

<pallas_src>
import math
from functools import partial

import jax
import jax.numpy as jnp
from jax.experimental import pallas as pl
from jax.experimental.pallas import tpu as pltpu

LANE = 128


def _leaky(v):
    return jnp.where(v >= 0, v, jnp.float32(0.01) * v)


def gcn_kernel(x_ref, a_ref, w_ref, o_ref, *, K, pack):
    Bt = x_ref.shape[0]
    n = a_ref.shape[1]
    in_dim = x_ref.shape[2]
    out_p = o_ref.shape[2]

    # ---- all K of the x @ W_k matmuls as ONE dense matmul ------------------
    # x: (Bt, n, in_dim) -> (Bt*n, in_dim);  W2: (in_dim, K*out_p).
    x2 = x_ref[...].reshape(Bt * n, in_dim)
    xw_all = jnp.dot(x2, w_ref[...],
                     preferred_element_type=jnp.float32)        # (Bt*n, K*out_p)

    # k = 0 term: adj_0 = I  ->  leaky_relu(x @ W_0)
    acc0 = _leaky(xw_all[:, :out_p])                            # (Bt*n, out_p)

    if K == 1:
        o_ref[...] = acc0.reshape(Bt, n, out_p).astype(o_ref.dtype)
        return

    # ---- BatchAdjNorm pieces: A' = relu(A) with unit diagonal --------------
    a = a_ref[...]                                              # (Bt, n, n)
    row = jax.lax.broadcasted_iota(jnp.int32, (n, n), 0)
    col = jax.lax.broadcasted_iota(jnp.int32, (n, n), 1)
    is_diag = (row == col)[None, :, :]
    ap = jnp.where(is_diag, jnp.float32(1.0), jnp.maximum(a, jnp.float32(0.0)))

    # L**k (elementwise) == dinv**k (rows) * A'**k (elementwise) * dinv**k (cols)
    # so each order-k term is  dinv**k * (A'**k @ (dinv**k * xw_k))  — pure
    # sublane row-scales, no lane broadcast, no D@A@D on the MXU.

    if pack > 1:
        # ---- block-diagonal batch packing: `pack` graphs per MXU tile ------
        zero_blk = jnp.zeros((n, n), jnp.float32)
        n_groups = Bt // pack
        for g in range(n_groups):
            b0 = g * pack
            stripes = []
            for b in range(pack):
                blocks = [ap[b0 + b] if q == b else zero_blk for q in range(pack)]
                stripes.append(jnp.concatenate(blocks, axis=1))
            ablk = jnp.concatenate(stripes, axis=0)             # (pack*n, pack*n)
            # row sums of the block-diag == per-graph degree sums
            dg = jax.lax.rsqrt(jnp.sum(ablk, axis=1, keepdims=True)
                               + jnp.float32(1e-10))            # (pack*n, 1)

            r0 = b0 * n
            acc_g = acc0[r0:r0 + pack * n, :]
            apow = ablk
            dpow = dg
            for k in range(1, K):
                xw_k = xw_all[r0:r0 + pack * n, k * out_p:(k + 1) * out_p]
                y = jnp.dot(apow, dpow * xw_k,
                            preferred_element_type=jnp.float32)
                acc_g = acc_g + _leaky(dpow * y)
                if k + 1 < K:
                    apow = apow * ablk
                    dpow = dpow * dg
            o_ref[b0:b0 + pack] = acc_g.reshape(pack, n, out_p).astype(o_ref.dtype)
    else:
        d = jnp.sum(ap, axis=2, keepdims=True)                  # (Bt, n, 1)
        dinv = jax.lax.rsqrt(d + jnp.float32(1e-10))            # EUP
        acc = acc0.reshape(Bt, n, out_p)
        apow = ap
        dpow = dinv
        for k in range(1, K):
            xw_k = xw_all[:, k * out_p:(k + 1) * out_p].reshape(Bt, n, out_p)
            y = jnp.einsum('bij,bjo->bio', apow, dpow * xw_k,
                           preferred_element_type=jnp.float32)
            acc = acc + _leaky(dpow * y)
            if k + 1 < K:
                apow = apow * ap
                dpow = dpow * dinv
        o_ref[...] = acc.astype(o_ref.dtype)


def _vmem_policy():
    """Per-generation VMEM sizing (works on v5e/v6e 128 MiB and v7x 64 MiB)."""
    try:
        physical = int(pltpu.get_tpu_info().vmem_capacity_bytes)
    except Exception:
        physical = 64 << 20          # conservative fallback (v7x per-TC size)
    budget = min(48 << 20, physical // 3)   # working-set budget for tile pick
    cap = (physical * 3) // 4               # never request > 3/4 of physical
    return budget, cap


def _estimate_step_bytes(Bt, n, in_dim, out_p, K, pack):
    elems = 0
    elems += 2 * Bt * n * in_dim          # x block (double-buffered)
    elems += 2 * Bt * n * n               # A block (double-buffered)
    elems += 2 * in_dim * K * out_p       # W block (double-buffered)
    elems += 2 * Bt * n * out_p           # out block (double-buffered)
    elems += 2 * Bt * n * n               # A' / power-chain temporaries
    elems += Bt * n * K * out_p           # xw_all
    elems += 3 * Bt * n * out_p           # acc / y / leaky temporaries
    if pack > 1:
        elems += 3 * (pack * n) ** 2      # block-diag build + power chain
    return 4 * elems


def _largest_divisor_leq(x, cap):
    for p in range(min(x, cap), 0, -1):
        if x % p == 0:
            return p
    return 1


def _pick_tiling(bs, n, in_dim, out_p, K, budget):
    max_pack = max(1, LANE // n)
    # Keep >= 2 grid steps whenever bs >= 2 so v7x's 2 TensorCores both work.
    bt_cap = max(1, min(bs // 2 if bs >= 2 else bs, 64))
    best = 1
    for bt in range(bt_cap, 0, -1):
        if bs % bt:
            continue
        pack = _largest_divisor_leq(bt, max_pack)
        if _estimate_step_bytes(bt, n, in_dim, out_p, K, pack) <= budget:
            best = bt
            break
    pack = _largest_divisor_leq(best, max_pack)
    return best, pack


def gcn_forward(x, A, W):
    """x: (bs, n, in_dim), A: (bs, n, n), W: (K, in_dim, out_dim)."""
    bs, n, in_dim = x.shape
    K, _, out_dim = W.shape

    # Lane-dense output: pad out_dim to a multiple of 128 (padded columns stay
    # exactly zero since leaky_relu(0) == 0), slice back at the end.
    out_p = ((out_dim + LANE - 1) // LANE) * LANE
    if out_p != out_dim:
        W = jnp.pad(W, ((0, 0), (0, 0), (0, out_p - out_dim)))
    # (K, in_dim, out_p) -> (in_dim, K*out_p): all x @ W_k become one matmul.
    W2 = jnp.transpose(W, (1, 0, 2)).reshape(in_dim, K * out_p)

    budget, cap = _vmem_policy()
    Bt, pack = _pick_tiling(bs, n, in_dim, out_p, K, budget)
    est = _estimate_step_bytes(Bt, n, in_dim, out_p, K, pack)
    vmem_limit = int(min(max(est + (8 << 20), 32 << 20), cap))
    # TODO(synk): for n so large that even Bt=1 exceeds the VMEM budget, add a
    # node-tiling grid axis that streams column tiles of A with a resident acc.

    kernel = partial(gcn_kernel, K=K, pack=pack)
    out = pl.pallas_call(
        kernel,
        out_shape=jax.ShapeDtypeStruct((bs, n, out_p), jnp.float32),
        grid=(bs // Bt,),
        in_specs=[
            pl.BlockSpec((Bt, n, in_dim), lambda b: (b, 0, 0)),
            pl.BlockSpec((Bt, n, n), lambda b: (b, 0, 0)),
            pl.BlockSpec((in_dim, K * out_p), lambda b: (0, 0)),
        ],
        out_specs=pl.BlockSpec((Bt, n, out_p), lambda b: (b, 0, 0)),
        compiler_params=pltpu.CompilerParams(
            dimension_semantics=("parallel",),
            vmem_limit_bytes=vmem_limit),
    )(x, A, W2)

    return out[..., :out_dim]


def gcn_reference(x, A, W):
    """Pure-JAX reference mirroring the PyTorch forward, for validation."""
    bs, n, _ = A.shape
    A = jnp.maximum(A, 0.0)
    eye = jnp.eye(n, dtype=A.dtype)
    A = A * (1.0 - eye) + eye
    d = jnp.sum(A, axis=2)
    dinv = 1.0 / jnp.sqrt(d + 1e-10)
    D = jax.vmap(jnp.diag)(dinv)
    L = D @ A @ D
    K = W.shape[0]

    def leaky(v):
        return jnp.where(v >= 0, v, 0.01 * v)

    res = leaky(x @ W[0])          # adj_0 = I
    Lp = L
    for k in range(1, K):
        res = res + leaky((Lp @ x) @ W[k])
        Lp = Lp * L
    return res


def _run_case(bs, n, in_dim, out_dim, K):
    key = jax.random.PRNGKey(0)
    kx, ka, kw = jax.random.split(key, 3)
    x = jax.random.normal(kx, (bs, n, in_dim), dtype=jnp.float32)
    A = jax.random.normal(ka, (bs, n, n), dtype=jnp.float32)
    # GraphConvolution weight init: kaiming_uniform(a=sqrt(5)) on an
    # (in_channels, out_channels) tensor -> U(-1/sqrt(fan_in), 1/sqrt(fan_in))
    # with fan_in = out_channels (PyTorch's size(1) convention).
    bound = 1.0 / math.sqrt(out_dim)
    W = jax.random.uniform(kw, (K, in_dim, out_dim), dtype=jnp.float32,
                           minval=-bound, maxval=bound)

    out = jax.block_until_ready(gcn_forward(x, A, W))
    ref = gcn_reference(x, A, W)
    assert out.shape == (bs, n, out_dim)
    assert jnp.allclose(out, ref, atol=1e-4, rtol=1e-4), \
        f"mismatch vs reference (bs={bs}, n={n})"


if __name__ == "__main__":
    # Per-batch (einsum) path: bs=2 -> Bt=1 per step, 2-step parallel grid.
    _run_case(bs=2, n=16, in_dim=8, out_dim=32, K=3)
    # Block-diagonal batch-packing path: bs=8 -> Bt=4, pack=4.
    _run_case(bs=8, n=16, in_dim=8, out_dim=32, K=3)
    print("KERNEL_OK")
</pallas_src>

<mosaic_0001>
module attributes {stable_mosaic.version = 11 : i64} {
  func.func @gcn_kernel(%arg0: i32, %arg1: memref<1x16x8xf32, #tpu.memory_space<vmem>>, %arg2: memref<1x16x16xf32, #tpu.memory_space<vmem>>, %arg3: memref<8x384xf32, #tpu.memory_space<vmem>>, %arg4: memref<1x16x128xf32, #tpu.memory_space<vmem>>) attributes {dimension_semantics = [#tpu.dimension_semantics<parallel>], iteration_bounds = array<i64: 2>, scalar_prefetch = 0 : i64, scratch_operands = 0 : i64, tpu.core_type = #tpu.core_type<tc>, window_params = [{transform_indices = @transform_0, window_bounds = array<i64: 1, 16, 8>}, {transform_indices = @transform_1, window_bounds = array<i64: 1, 16, 16>}, {pipeline_mode = #tpu.pipeline_mode<synchronous>, transform_indices = @transform_2, window_bounds = array<i64: 8, 384>}, {transform_indices = @transform_3, window_bounds = array<i64: 1, 16, 128>}]} {
    %c0 = arith.constant 0 : index
    %c0_0 = arith.constant 0 : index
    %c0_1 = arith.constant 0 : index
    %0 = vector.load %arg1[%c0, %c0_0, %c0_1] : memref<1x16x8xf32, #tpu.memory_space<vmem>>, vector<1x16x8xf32>
    %1 = vector.shape_cast %0 : vector<1x16x8xf32> to vector<16x8xf32>
    %c0_2 = arith.constant 0 : index
    %c0_3 = arith.constant 0 : index
    %2 = vector.load %arg3[%c0_2, %c0_3] : memref<8x384xf32, #tpu.memory_space<vmem>>, vector<8x384xf32>
    %cst = arith.constant dense<0.000000e+00> : vector<16x384xf32>
    %3 = tpu.matmul %1, %2, %cst {dimension_numbers = #tpu.dot_dimension_numbers<[1], [0], [0], [1], [0, 0, 1, 1], [], []>} : vector<16x8xf32>, vector<8x384xf32>, vector<16x384xf32> -> vector<16x384xf32>
    %4 = vector.extract_strided_slice %3 {offsets = [0, 0], sizes = [16, 128], strides = [1, 1]} : vector<16x384xf32> to vector<16x128xf32>
    %cst_4 = arith.constant 0.000000e+00 : f32
    %5 = vector.broadcast %cst_4 : f32 to vector<16x128xf32>
    %6 = arith.cmpf oge, %4, %5 : vector<16x128xf32>
    %cst_5 = arith.constant 0.00999999977 : f32
    %7 = vector.broadcast %cst_5 : f32 to vector<16x128xf32>
    %8 = arith.mulf %7, %4 : vector<16x128xf32>
    %9 = arith.select %6, %4, %8 : vector<16x128xi1>, vector<16x128xf32>
    %c0_6 = arith.constant 0 : index
    %c0_7 = arith.constant 0 : index
    %c0_8 = arith.constant 0 : index
    %10 = vector.load %arg2[%c0_6, %c0_7, %c0_8] : memref<1x16x16xf32, #tpu.memory_space<vmem>>, vector<1x16x16xf32>
    %11 = tpu.iota {dimensions = array<i32: 0>} : vector<16x16xi32>
    %12 = tpu.iota {dimensions = array<i32: 1>} : vector<16x16xi32>
    %13 = arith.cmpi eq, %11, %12 : vector<16x16xi32>
    %14 = vector.shape_cast %13 : vector<16x16xi1> to vector<1x16x16xi1>
    %cst_9 = arith.constant 0.000000e+00 : f32
    %15 = vector.broadcast %cst_9 : f32 to vector<1x16x16xf32>
    %16 = arith.maximumf %10, %15 : vector<1x16x16xf32>
    %cst_10 = arith.constant 1.000000e+00 : f32
    %17 = vector.broadcast %cst_10 : f32 to vector<1x16x16xf32>
    %18 = arith.select %14, %17, %16 : vector<1x16x16xi1>, vector<1x16x16xf32>
    %cst_11 = arith.constant dense<0.000000e+00> : vector<1x16xf32>
    %19 = vector.multi_reduction <add>, %18, %cst_11 [2] : vector<1x16x16xf32> to vector<1x16xf32>
    %20 = vector.shape_cast %19 : vector<1x16xf32> to vector<1x16x1xf32>
    %cst_12 = arith.constant 1.000000e-10 : f32
    %21 = vector.broadcast %cst_12 : f32 to vector<1x16x1xf32>
    %22 = arith.addf %20, %21 : vector<1x16x1xf32>
    %23 = math.rsqrt %22 : vector<1x16x1xf32>
    %24 = vector.shape_cast %9 : vector<16x128xf32> to vector<1x16x128xf32>
    %25 = vector.extract_strided_slice %3 {offsets = [0, 128], sizes = [16, 128], strides = [1, 1]} : vector<16x384xf32> to vector<16x128xf32>
    %26 = vector.shape_cast %25 : vector<16x128xf32> to vector<1x16x128xf32>
    %27 = vector.broadcast %23 : vector<1x16x1xf32> to vector<1x16x128xf32>
    %28 = arith.mulf %27, %26 : vector<1x16x128xf32>
    "tpu.trace_start"() <{level = 10 : i32, message = "bij,bjo->bio"}> : () -> ()
    %cst_13 = arith.constant dense<0.000000e+00> : vector<1x16x128xf32>
    %29 = tpu.matmul %18, %28, %cst_13 {dimension_numbers = #tpu.dot_dimension_numbers<[2], [1], [1], [2], [0, 0, 0, 1, 1, 2], [0], [0]>} : vector<1x16x16xf32>, vector<1x16x128xf32>, vector<1x16x128xf32> -> vector<1x16x128xf32>
    "tpu.trace_stop"() : () -> ()
    %30 = vector.broadcast %23 : vector<1x16x1xf32> to vector<1x16x128xf32>
    %31 = arith.mulf %30, %29 : vector<1x16x128xf32>
    %cst_14 = arith.constant 0.000000e+00 : f32
    %32 = vector.broadcast %cst_14 : f32 to vector<1x16x128xf32>
    %33 = arith.cmpf oge, %31, %32 : vector<1x16x128xf32>
    %cst_15 = arith.constant 0.00999999977 : f32
    %34 = vector.broadcast %cst_15 : f32 to vector<1x16x128xf32>
    %35 = arith.mulf %34, %31 : vector<1x16x128xf32>
    %36 = arith.select %33, %31, %35 : vector<1x16x128xi1>, vector<1x16x128xf32>
    %37 = arith.addf %24, %36 : vector<1x16x128xf32>
    %38 = arith.mulf %18, %18 : vector<1x16x16xf32>
    %39 = arith.mulf %23, %23 : vector<1x16x1xf32>
    %40 = vector.extract_strided_slice %3 {offsets = [0, 256], sizes = [16, 128], strides = [1, 1]} : vector<16x384xf32> to vector<16x128xf32>
    %41 = vector.shape_cast %40 : vector<16x128xf32> to vector<1x16x128xf32>
    %42 = vector.broadcast %39 : vector<1x16x1xf32> to vector<1x16x128xf32>
    %43 = arith.mulf %42, %41 : vector<1x16x128xf32>
    "tpu.trace_start"() <{level = 10 : i32, message = "bij,bjo->bio"}> : () -> ()
    %cst_16 = arith.constant dense<0.000000e+00> : vector<1x16x128xf32>
    %44 = tpu.matmul %38, %43, %cst_16 {dimension_numbers = #tpu.dot_dimension_numbers<[2], [1], [1], [2], [0, 0, 0, 1, 1, 2], [0], [0]>} : vector<1x16x16xf32>, vector<1x16x128xf32>, vector<1x16x128xf32> -> vector<1x16x128xf32>
    "tpu.trace_stop"() : () -> ()
    %45 = vector.broadcast %39 : vector<1x16x1xf32> to vector<1x16x128xf32>
    %46 = arith.mulf %45, %44 : vector<1x16x128xf32>
    %cst_17 = arith.constant 0.000000e+00 : f32
    %47 = vector.broadcast %cst_17 : f32 to vector<1x16x128xf32>
    %48 = arith.cmpf oge, %46, %47 : vector<1x16x128xf32>
    %cst_18 = arith.constant 0.00999999977 : f32
    %49 = vector.broadcast %cst_18 : f32 to vector<1x16x128xf32>
    %50 = arith.mulf %49, %46 : vector<1x16x128xf32>
    %51 = arith.select %48, %46, %50 : vector<1x16x128xi1>, vector<1x16x128xf32>
    %52 = arith.addf %37, %51 : vector<1x16x128xf32>
    %c0_19 = arith.constant 0 : index
    %c0_20 = arith.constant 0 : index
    %c0_21 = arith.constant 0 : index
    %53 = vector.load %arg4[%c0_19, %c0_20, %c0_21] : memref<1x16x128xf32, #tpu.memory_space<vmem>>, vector<1x16x128xf32>
    tpu.vector_store %arg4[%c0_19, %c0_20, %c0_21], %52 {strides = array<i32>} : memref<1x16x128xf32, #tpu.memory_space<vmem>>, vector<1x16x128xf32>,
    return
  }
  func.func @transform_0(%arg0: i32) -> (i32, i32, i32) {
    %c0_i32 = arith.constant 0 : i32
    %c0_i32_0 = arith.constant 0 : i32
    %c0_i32_1 = arith.constant 0 : i32
    return %arg0, %c0_i32, %c0_i32_0 : i32, i32, i32
  }
  func.func @transform_1(%arg0: i32) -> (i32, i32, i32) {
    %c0_i32 = arith.constant 0 : i32
    %c0_i32_0 = arith.constant 0 : i32
    %c0_i32_1 = arith.constant 0 : i32
    return %arg0, %c0_i32, %c0_i32_0 : i32, i32, i32
  }
  func.func @transform_2(%arg0: i32) -> (i32, i32) {
    %c0_i32 = arith.constant 0 : i32
    %c0_i32_0 = arith.constant 0 : i32
    %c0_i32_1 = arith.constant 0 : i32
    return %c0_i32, %c0_i32_0 : i32, i32
  }
  func.func @transform_3(%arg0: i32) -> (i32, i32, i32) {
    %c0_i32 = arith.constant 0 : i32
    %c0_i32_0 = arith.constant 0 : i32
    %c0_i32_1 = arith.constant 0 : i32
    return %arg0, %c0_i32, %c0_i32_0 : i32, i32, i32
  }
}

</mosaic_0001>

<llo_original>
// kernel: tpu_custom_call.1
$region0: #{tpu_custom_call.1}
  #allocation0 [shape = 'u32[]', space=smem, size = 0x4, offset = 0x4, fixed_abs, tag = 'smem constant byte address 0x4 - core index']
  #allocation1 [shape = 'u32[72,128]{1,0:T(1,128)}', space=vmem, size = 0x9000, scoped, tag = 'internal scratch']
  %s0 = inlined_call_operand.vmem [shape: f32[2,16,8], index: 0, kind: input, shape index: {}]
  %s1 = inlined_call_operand.vmem [shape: f32[2,16,16], index: 1, kind: input, shape index: {}]
  %s2 = inlined_call_operand.hbm [shape: f32[8,384], index: 2, kind: input, shape index: {}]
  %s3 = inlined_call_operand.hbm [shape: f32[2,16,128], index: 3, kind: output, shape index: {}]
  %s4 = sld [smem:[#allocation0]]
  $region49: #{tpu_custom_call.1} parent=0
    _
  %s6 = ssub.s32 1, %s4
  %s7 = scalar_select 0, %s6, %s4
  $region1: #{tpu_custom_call.1} parent=0
    #allocation2 [shape = 'u8[12288]{0}', space=vmem, size = 0x3000, scoped, tag = 'input window, operand 2, single buffered']
    #allocation3 [shape = 's32[2]{0}', space=sflag, size = 0x8, scoped, tag = 'scoped memory for tpu_custom_call.1']
    #allocation4 [shape = 's32[2]{0}', space=sflag, size = 0x8, scoped, tag = 'scoped memory for tpu_custom_call.1']
    #allocation5 [shape = 'u8[16384]{0}', space=vmem, size = 0x4000, scoped, tag = 'output window, operand 0']
    %8 = vsyncpa [#allocation3], 0
    %9 = vsyncpa [#allocation4], 0
    %s10 = scalar_lea.sflag [#allocation4], 1
    %11 = vsyncpa %s10, 0
    loop: start=0, step=1, limit=4
    $region2: #{tpu_custom_call.1} parent=1 // loop_pre_header
      _
    $region3: #{tpu_custom_call.1} parent=1 // loop_header
      %s13 = sphi 0, %s17
      %p14 = scmp.ge.s32.totalorder %s13, 4
      %s23 = sphi 0, %s25
      %s26 = sphi 0, %s23
      %s27 = sphi 0, %s26
      %s43 = sphi 0, %s27
      %s49 = sphi 0, %s51
      %s52 = sphi 0, %s49
      %s53 = sphi 0, %s52
      %s69 = sphi 0, %s53
      %s73 = sphi 0, %s73
      %s75 = sphi 0, %s73
      %s76 = sphi 0, %s75
      %s90 = sphi 0, %s76
      %s96 = sphi 0, %s98
      %s99 = sphi 0, %s96
      %s100 = sphi 0, %s99
      %s116 = sphi 0, %s100
    $region4: #{tpu_custom_call.1} parent=1 // loop_header_branch
      %16 = sbr.rel (%p14) target = $region8
    $region5: #{tpu_custom_call.1} parent=1 // loop_body
      %s18 = ssub.s32 %s13, 1
      %s19 = ssub.s32 %s13, 2
      %s20 = sadd.s32 %s13, 1
      %s21 = ssub.s32 %s13, %s20
      %p22 = scmp.eq.s32.totalorder %s21, 0
      %s24 = sadd.s32 %s23, 1
      %s25 = scalar_select %p22, %s23, %s24
      %p28 = pneg %p22
      %p29 = scmp.eq.s32.totalorder %s13, 1
      %p30 = por %p28, %p29
      %p31 = scmp.ne.s32.totalorder %s23, %s26
      %p32 = scmp.eq.s32.totalorder %s13, 0
      %p33 = por %p31, %p32
      %p34 = scmp.ne.s32.totalorder %s23, %s26
      %p35 = scmp.eq.s32.totalorder %s18, 1
      %p36 = por %p34, %p35
      %p37 = scmp.ne.s32.totalorder %s26, %s27
      %p38 = scmp.eq.s32.totalorder %s18, 0
      %p39 = por %p37, %p38
      %p40 = scmp.ne.s32.totalorder %s26, %s27
      %p41 = scmp.eq.s32.totalorder %s19, 1
      %p42 = por %p40, %p41
      %p44 = scmp.ne.s32.totalorder %s27, %s43
      %p45 = scmp.eq.s32.totalorder %s19, 0
      %p46 = por %p44, %p45
      %s47 = ssub.s32 %s13, %s20
      %p48 = scmp.eq.s32.totalorder %s47, 0
      %s50 = sadd.s32 %s49, 1
      %s51 = scalar_select %p48, %s49, %s50
      %p54 = pneg %p48
      %p55 = scmp.eq.s32.totalorder %s13, 1
      %p56 = por %p54, %p55
      %p57 = scmp.ne.s32.totalorder %s49, %s52
      %p58 = scmp.eq.s32.totalorder %s13, 0
      %p59 = por %p57, %p58
      %p60 = scmp.ne.s32.totalorder %s49, %s52
      %p61 = scmp.eq.s32.totalorder %s18, 1
      %p62 = por %p60, %p61
      %p63 = scmp.ne.s32.totalorder %s52, %s53
      %p64 = scmp.eq.s32.totalorder %s18, 0
      %p65 = por %p63, %p64
      %p66 = scmp.ne.s32.totalorder %s52, %s53
      %p67 = scmp.eq.s32.totalorder %s19, 1
      %p68 = por %p66, %p67
      %p70 = scmp.ne.s32.totalorder %s53, %s69
      %p71 = scmp.eq.s32.totalorder %s19, 0
      %p72 = por %p70, %p71
      %s74 = sadd.s32 %s73, 1
      %p77 = scmp.eq.s32.totalorder %s13, 1
      %p78 = scmp.ne.s32.totalorder %s73, %s75
      %p79 = scmp.eq.s32.totalorder %s13, 0
      %p80 = por %p78, %p79
      %p81 = scmp.ne.s32.totalorder %s73, %s75
      %p82 = scmp.eq.s32.totalorder %s18, 1
      %p83 = por %p81, %p82
      %p84 = scmp.ne.s32.totalorder %s75, %s76
      %p85 = scmp.eq.s32.totalorder %s18, 0
      %p86 = por %p84, %p85
      %p87 = scmp.ne.s32.totalorder %s75, %s76
      %p88 = scmp.eq.s32.totalorder %s19, 1
      %p89 = por %p87, %p88
      %p91 = scmp.ne.s32.totalorder %s76, %s90
      %p92 = scmp.eq.s32.totalorder %s19, 0
      %p93 = por %p91, %p92
      %s94 = ssub.s32 %s13, %s20
      %p95 = scmp.eq.s32.totalorder %s94, 0
      %s97 = sadd.s32 %s96, 1
      %s98 = scalar_select %p95, %s96, %s97
      %p101 = pneg %p95
      %p102 = scmp.eq.s32.totalorder %s13, 1
      %p103 = por %p101, %p102
      %p104 = scmp.ne.s32.totalorder %s96, %s99
      %p105 = scmp.eq.s32.totalorder %s13, 0
      %p106 = por %p104, %p105
      %p107 = scmp.ne.s32.totalorder %s96, %s99
      %p108 = scmp.eq.s32.totalorder %s18, 1
      %p109 = por %p107, %p108
      %p110 = scmp.ne.s32.totalorder %s99, %s100
      %p111 = scmp.eq.s32.totalorder %s18, 0
      %p112 = por %p110, %p111
      %p113 = scmp.ne.s32.totalorder %s99, %s100
      %p114 = scmp.eq.s32.totalorder %s19, 1
      %p115 = por %p113, %p114
      %p117 = scmp.ne.s32.totalorder %s100, %s116
      %p118 = scmp.eq.s32.totalorder %s19, 0
      %p119 = por %p117, %p118
      %p120 = scmp.le.s32.totalorder 1, %s13
      %p121 = scmp.lt.s32.totalorder %s13, 3
      %p122 = pnand %p120, %p121
      %p123 = pneg %p122
      // Predicated region
      $region9: #{tpu_custom_call.1} parent=5 // pred_check
        _
      $region10: #{tpu_custom_call.1} parent=5 // pred_check_branch
        %125 = sbr.rel (%p122) target = $region12
      $region11: #{tpu_custom_call.1} parent=5 // pred_region
        %s126 = ssub.s32 %s13, 1
        // Predicated region
        $region13: #{tpu_custom_call.1} parent=11 // pred_check
          %p127 = pneg %p86
        $region14: #{tpu_custom_call.1} parent=11 // pred_check_branch
          %129 = sbr.rel (%p127) target = $region16
        $region15: #{tpu_custom_call.1} parent=11 // pred_region
          %131 = vsyncadd [#allocation3], 0
          %s133 = sshll.u32 %s2, 4
          %s134 = int_to_ptr.hbm [resolvable:$true] %s133
          %s135 = sshll.u32 [#allocation2], 4
          %s136 = int_to_ptr.vmem [resolvable:$true] %s135
          %138 = dma.hbm_to_vmem [thread:$0]  %s134, 384, %s136, [#allocation3]
        $region16: #{tpu_custom_call.1} parent=11 // pred_fallthru
          _
      $region12: #{tpu_custom_call.1} parent=5 // pred_fallthru
        _
      %p139 = scmp.lt.s32.totalorder %s13, 2
      // Predicated region
      $region17: #{tpu_custom_call.1} parent=5 // pred_check
        %p140 = pneg %p139
      $region18: #{tpu_custom_call.1} parent=5 // pred_check_branch
        %142 = sbr.rel (%p140) target = $region20
      $region19: #{tpu_custom_call.1} parent=5 // pred_region
        // Predicated region
        $region21: #{tpu_custom_call.1} parent=19 // pred_check
          %p143 = pneg %p33
        $region22: #{tpu_custom_call.1} parent=19 // pred_check_branch
          %145 = sbr.rel (%p143) target = $region24
        $region23: #{tpu_custom_call.1} parent=19 // pred_region
          %p146 = scmp.lt.s32.totalorder %s13, 1
          %s147 = scalar_select %p146, %s13, 1
          %s148 = smul.addr %s147, 2
          %s149 = smul.addr %s148, 8
          %s150 = scalar_lea.vmem %s0, %s149
        $region24: #{tpu_custom_call.1} parent=19 // pred_fallthru
          _
        // Predicated region
        $region25: #{tpu_custom_call.1} parent=19 // pred_check
          %p151 = pneg %p59
        $region26: #{tpu_custom_call.1} parent=19 // pred_check_branch
          %153 = sbr.rel (%p151) target = $region28
        $region27: #{tpu_custom_call.1} parent=19 // pred_region
          %p154 = scmp.lt.s32.totalorder %s13, 1
          %s155 = scalar_select %p154, %s13, 1
          %s156 = smul.addr %s155, 2
          %s157 = smul.addr %s156, 8
          %s158 = scalar_lea.vmem %s1, %s157
        $region28: #{tpu_custom_call.1} parent=19 // pred_fallthru
          _
      $region20: #{tpu_custom_call.1} parent=5 // pred_fallthru
        _
      %p159 = scmp.le.s32.totalorder 1, %s13
      %p160 = scmp.lt.s32.totalorder %s13, 3
      %p161 = pnand %p159, %p160
      %p162 = pneg %p161
      // Predicated region
      $region29: #{tpu_custom_call.1} parent=5 // pred_check
        _
      $region30: #{tpu_custom_call.1} parent=5 // pred_check_branch
        %164 = sbr.rel (%p161) target = $region32
      $region31: #{tpu_custom_call.1} parent=5 // pred_region
        %s165 = ssub.s32 %s13, 1
        // Predicated region
        $region33: #{tpu_custom_call.1} parent=31 // pred_check
          %p166 = pneg %p86
        $region34: #{tpu_custom_call.1} parent=31 // pred_check_branch
          %168 = sbr.rel (%p166) target = $region36
        $region35: #{tpu_custom_call.1} parent=31 // pred_region
          %170 = dma.done [#allocation3], 384
        $region36: #{tpu_custom_call.1} parent=31 // pred_fallthru
          _
        %p171 = scmp.lt.s32.totalorder %s18, 1
        %s172 = scalar_select %p171, %s18, 1
        %s173 = smul.addr %s172, 2
        %s174 = smul.addr %s173, 8
        %s175 = scalar_lea.vmem %s0, %s174
        %p176 = pneg %p39
        %p177 = pneg %p36
        %p178 = scmp.lt.s32.totalorder %s18, 1
        %s179 = scalar_select %p178, %s18, 1
        %s180 = smul.addr %s179, 2
        %s181 = smul.addr %s180, 8
        %s182 = scalar_lea.vmem %s1, %s181
        %p183 = pneg %p65
        %p184 = pneg %p62
        %p185 = pneg %p86
        %p186 = pneg %p83
        %p187 = pneg %p112
        %p188 = pneg %p109
        %s189 = sand.u32 %s99, 1
        %s190 = scalar_lea.sflag [#allocation4], %s189
        %s191 = sand.u32 %s99, 1
        %s192 = smul.addr %s191, 16
        %s193 = scalar_lea.vmem [#allocation5], %s192
        %p194 = scmp.lt.s32.totalorder %s18, 1
        %s195 = scalar_select %p194, %s18, 1
        %s196 = smul.addr %s195, 2
        %s197 = smul.addr %s196, 8
        %s198 = scalar_lea.vmem %s0, %s197
        %p199 = scmp.lt.s32.totalorder %s18, 1
        %s200 = scalar_select %p199, %s18, 1
        %s201 = smul.addr %s200, 2
        %s202 = smul.addr %s201, 8
        %s203 = scalar_lea.vmem %s1, %s202
        %v204 = vld [vmem:[%s198] sm:$0xff]
        %v205 = vld [vmem:[%s198 + $0x8] sm:$0xff]
        %v206 = vld [vmem:[#allocation2] sm:$0xff]
        %v207 = vld [vmem:[#allocation2 + $0x8] sm:$0xff]
        %v208 = vld [vmem:[#allocation2 + $0x10] sm:$0xff]
        %vm209 = vcmask 64512
        %v211 = vsel %vm209, %v204, 0
        %v214 = vsel %vm209, %v205, 0
        %216 = vmatpush.msra.mxu0 0.0
        %217 = vmatpush.msra.mxu0 0.0
        %218 = vmatpush.msra.mxu0 0.0
        %219 = vmatpush.msra.mxu0 0.0
        %220 = vmatpush.msra.mxu0 0.0
        %221 = vmatpush.msra.mxu0 0.0
        %222 = vmatpush.msra.mxu0 0.0
        %223 = vmatpush.msra.mxu0 0.0
        %224 = vmatpush.msra.mxu0 0.0
        %225 = vmatpush.msra.mxu0 0.0
        %226 = vmatpush.msra.mxu0 0.0
        %227 = vmatpush.msra.mxu0 0.0
        %228 = vmatpush.msra.mxu0 0.0
        %229 = vmatpush.msra.mxu0 0.0
        %230 = vmatpush.msra.mxu0 0.0
        %231 = vmatpush.msra.mxu0 %v206
        %232 = vmatmul.f32.gmra.mxu0 %v211
        %v233 = vpop.f32.mrf.mxu0
        %v234 = vadd.f32 0.0, %v233
        %235 = vmatmul.f32.gmra.mxu0 %v214
        %v236 = vpop.f32.mrf.mxu0
        %v237 = vadd.f32 0.0, %v236
        %238 = vdwg.mxu0
        %239 = vmatpush.msra.mxu0 0.0
        %240 = vmatpush.msra.mxu0 0.0
        %241 = vmatpush.msra.mxu0 0.0
        %242 = vmatpush.msra.mxu0 0.0
        %243 = vmatpush.msra.mxu0 0.0
        %244 = vmatpush.msra.mxu0 0.0
        %245 = vmatpush.msra.mxu0 0.0
        %246 = vmatpush.msra.mxu0 0.0
        %247 = vmatpush.msra.mxu0 0.0
        %248 = vmatpush.msra.mxu0 0.0
        %249 = vmatpush.msra.mxu0 0.0
        %250 = vmatpush.msra.mxu0 0.0
        %251 = vmatpush.msra.mxu0 0.0
        %252 = vmatpush.msra.mxu0 0.0
        %253 = vmatpush.msra.mxu0 0.0
        %254 = vmatpush.msra.mxu0 %v207
        %255 = vmatmul.f32.gmra.mxu0 %v211
        %v256 = vpop.f32.mrf.mxu0
        %v257 = vadd.f32 0.0, %v256
        %258 = vmatmul.f32.gmra.mxu0 %v214
        %v259 = vpop.f32.mrf.mxu0
        %v260 = vadd.f32 0.0, %v259
        %261 = vdwg.mxu0
        %262 = vmatpush.msra.mxu0 0.0
        %263 = vmatpush.msra.mxu0 0.0
        %264 = vmatpush.msra.mxu0 0.0
        %265 = vmatpush.msra.mxu0 0.0
        %266 = vmatpush.msra.mxu0 0.0
        %267 = vmatpush.msra.mxu0 0.0
        %268 = vmatpush.msra.mxu0 0.0
        %269 = vmatpush.msra.mxu0 0.0
        %270 = vmatpush.msra.mxu0 0.0
        %271 = vmatpush.msra.mxu0 0.0
        %272 = vmatpush.msra.mxu0 0.0
        %273 = vmatpush.msra.mxu0 0.0
        %274 = vmatpush.msra.mxu0 0.0
        %275 = vmatpush.msra.mxu0 0.0
        %276 = vmatpush.msra.mxu0 0.0
        %277 = vmatpush.msra.mxu0 %v208
        %278 = vmatmul.f32.gmra.mxu0 %v211
        %v279 = vpop.f32.mrf.mxu0
        %v280 = vadd.f32 0.0, %v279
        %281 = vmatmul.f32.gmra.mxu0 %v214
        %v282 = vpop.f32.mrf.mxu0
        %v283 = vadd.f32 0.0, %v282
        %284 = vdwg.mxu0
        %vm285 = vcmp.ge.f32.partialorder %v234, 0.0
        %vm286 = vcmp.ge.f32.partialorder %v237, 0.0
        %v287 = vmul.f32 %v234, 0.01
        %v288 = vmul.f32 %v237, 0.01
        %v289 = vsel %vm285, %v234, %v287
        %v290 = vsel %vm286, %v237, %v288
        %v291 = vld [vmem:[%s203] sm:$0xff]
        %v292 = vld [vmem:[%s203 + $0x8] sm:$0xff]
        %v293 = vlaneseq
        %v294 = vshrl.u32 %v293, 7
        %v295 = vadd.s32 %v294, 8
        %v296 = vlaneseq
        %v297 = vand.u32 %v296, 127
        %vm298 = vcmp.eq.s32.totalorder %v294, %v297
        %vm299 = vcmp.eq.s32.totalorder %v295, %v297
        %v300 = vmax.f32 %v291, 0.0
        %v301 = vmax.f32 %v292, 0.0
        %v302 = vsel %vm298, 1.0, %v300
        %v303 = vsel %vm299, 1.0, %v301
        %vm304 = vcmask 130048
        %v305 = vsel %vm304, %v302, 0.0
        %306 = vadd.xlane.f32.xlu0 %v305
        %v307 = vpop.xlane.xlu0 %306
        %v308 = vsel %vm304, %v303, 0.0
        %309 = vadd.xlane.f32.xlu0 %v308
        %v310 = vpop.xlane.xlu0 %309
        %v311 = vadd.f32 %v307, 1e-10
        %v312 = vadd.f32 %v310, 1e-10
        %v313 = vrsqrt.pop %v311
        %v314 = vmul.f32 %v313, %v311
        %v315 = vmul.f32 %v314, %v313
        %v316 = vmul.f32 0.5, %v315
        %v317 = vsub.f32 1.5, %v316
        %v318 = vmul.f32 %v313, %v317
        %vm319 = vweird.f32 %v311
        %vm320 = vweird.f32 %v313
        %vm321 = vmor %vm319, %vm320
        %v322 = vsel %vm321, %v313, %v318
        %v323 = vrsqrt.pop %v312
        %v324 = vmul.f32 %v323, %v312
        %v325 = vmul.f32 %v324, %v323
        %v326 = vmul.f32 0.5, %v325
        %v327 = vsub.f32 1.5, %v326
        %v328 = vmul.f32 %v323, %v327
        %vm329 = vweird.f32 %v312
        %vm330 = vweird.f32 %v323
        %vm331 = vmor %vm329, %vm330
        %v332 = vsel %vm331, %v323, %v328
        %v333 = vmul.f32 %v322, %v257
        %v334 = vmul.f32 %v332, %v260
        %v336 = vsel %vm304, %v302, 0
        %v339 = vsel %vm304, %v303, 0
        %341 = vmatpush.msra.mxu0 0.0
        %342 = vmatpush.msra.mxu0 0.0
        %343 = vmatpush.msra.mxu0 0.0
        %344 = vmatpush.msra.mxu0 0.0
        %345 = vmatpush.msra.mxu0 0.0
        %346 = vmatpush.msra.mxu0 0.0
        %347 = vmatpush.msra.mxu0 0.0
        %348 = vmatpush.msra.mxu0 0.0
        %349 = vmatpush.msra.mxu0 0.0
        %350 = vmatpush.msra.mxu0 0.0
        %351 = vmatpush.msra.mxu0 0.0
        %352 = vmatpush.msra.mxu0 0.0
        %353 = vmatpush.msra.mxu0 0.0
        %354 = vmatpush.msra.mxu0 0.0
        %355 = vmatpush.msra.mxu0 %v334
        %356 = vmatpush.msra.mxu0 %v333
        %357 = vmatmul.f32.gmra.mxu0 %v336
        %v358 = vpop.f32.mrf.mxu0
        %v359 = vadd.f32 0.0, %v358
        %360 = vmatmul.f32.gmra.mxu0 %v339
        %v361 = vpop.f32.mrf.mxu0
        %v362 = vadd.f32 0.0, %v361
        %363 = vdwg.mxu0
        %v364 = vmul.f32 %v322, %v359
        %v365 = vmul.f32 %v332, %v362
        %vm366 = vcmp.ge.f32.partialorder %v364, 0.0
        %vm367 = vcmp.ge.f32.partialorder %v365, 0.0
        %v368 = vmul.f32 %v364, 0.01
        %v369 = vmul.f32 %v365, 0.01
        %v370 = vsel %vm366, %v364, %v368
        %v371 = vsel %vm367, %v365, %v369
        %v372 = vadd.f32 %v289, %v370
        %v373 = vadd.f32 %v290, %v371
        %v374 = vmul.f32 %v302, %v302
        %v375 = vmul.f32 %v303, %v303
        %v376 = vmul.f32 %v322, %v322
        %v377 = vmul.f32 %v332, %v332
        %v378 = vmul.f32 %v376, %v280
        %v379 = vmul.f32 %v377, %v283
        %v381 = vsel %vm304, %v374, 0
        %v384 = vsel %vm304, %v375, 0
        %386 = vmatpush.msra.mxu0 0.0
        %387 = vmatpush.msra.mxu0 0.0
        %388 = vmatpush.msra.mxu0 0.0
        %389 = vmatpush.msra.mxu0 0.0
        %390 = vmatpush.msra.mxu0 0.0
        %391 = vmatpush.msra.mxu0 0.0
        %392 = vmatpush.msra.mxu0 0.0
        %393 = vmatpush.msra.mxu0 0.0
        %394 = vmatpush.msra.mxu0 0.0
        %395 = vmatpush.msra.mxu0 0.0
        %396 = vmatpush.msra.mxu0 0.0
        %397 = vmatpush.msra.mxu0 0.0
        %398 = vmatpush.msra.mxu0 0.0
        %399 = vmatpush.msra.mxu0 0.0
        %400 = vmatpush.msra.mxu0 %v379
        %401 = vmatpush.msra.mxu0 %v378
        %402 = vmatmul.f32.gmra.mxu0 %v381
        %v403 = vpop.f32.mrf.mxu0
        %v404 = vadd.f32 0.0, %v403
        %405 = vmatmul.f32.gmra.mxu0 %v384
        %v406 = vpop.f32.mrf.mxu0
        %v407 = vadd.f32 0.0, %v406
        %408 = vdwg.mxu0
        %v409 = vmul.f32 %v376, %v404
        %v410 = vmul.f32 %v377, %v407
        %vm411 = vcmp.ge.f32.partialorder %v409, 0.0
        %vm412 = vcmp.ge.f32.partialorder %v410, 0.0
        %v413 = vmul.f32 %v409, 0.01
        %v414 = vmul.f32 %v410, 0.01
        %v415 = vsel %vm411, %v409, %v413
        %v416 = vsel %vm412, %v410, %v414
        %v417 = vadd.f32 %v372, %v415
        %v418 = vadd.f32 %v373, %v416
        %419 = vst [vmem:[%s193] sm:$0xff] %v417
        %420 = vst [vmem:[%s193 + $0x8] sm:$0xff] %v418
        %s421 = sand.u32 %s99, 1
        %s422 = scalar_lea.sflag [#allocation4], %s421
        %s423 = sand.u32 %s99, 1
        %s424 = smul.addr %s423, 16
        %s425 = scalar_lea.vmem [#allocation5], %s424
        // Predicated region
        $region37: #{tpu_custom_call.1} parent=31 // pred_check
          %p426 = pneg %p109
        $region38: #{tpu_custom_call.1} parent=31 // pred_check_branch
          %428 = sbr.rel (%p426) target = $region40
        $region39: #{tpu_custom_call.1} parent=31 // pred_region
          %430 = vsyncadd %s422, 0
          %s431 = smul.addr %s18, 2
          %s432 = smul.addr %s431, 8
          %s433 = scalar_lea.hbm %s3, %s432
          %s434 = sshll.u32 %s425, 4
          %s435 = int_to_ptr.vmem [resolvable:$true] %s434
          %s436 = sshll.u32 %s433, 4
          %s437 = int_to_ptr.hbm [resolvable:$true] %s436
          %442 = dma.vmem_to_hbm [thread:$0]  %s435, 256, %s437, %s422, 128, 128, 8
        $region40: #{tpu_custom_call.1} parent=31 // pred_fallthru
          _
      $region32: #{tpu_custom_call.1} parent=5 // pred_fallthru
        _
      %p443 = scmp.le.s32.totalorder 2, %s13
      // Predicated region
      $region41: #{tpu_custom_call.1} parent=5 // pred_check
        %p444 = pneg %p443
      $region42: #{tpu_custom_call.1} parent=5 // pred_check_branch
        %446 = sbr.rel (%p444) target = $region44
      $region43: #{tpu_custom_call.1} parent=5 // pred_region
        %s447 = ssub.s32 %s13, 2
        // Predicated region
        $region45: #{tpu_custom_call.1} parent=43 // pred_check
          %p448 = pneg %p115
        $region46: #{tpu_custom_call.1} parent=43 // pred_check_branch
          %450 = sbr.rel (%p448) target = $region48
        $region47: #{tpu_custom_call.1} parent=43 // pred_region
          %s451 = sand.u32 %s100, 1
          %s452 = scalar_lea.sflag [#allocation4], %s451
          %s453 = sand.u32 %s100, 1
          %s454 = smul.addr %s453, 16
          %s455 = scalar_lea.vmem [#allocation5], %s454
          %457 = dma.done %s452, 256
        $region48: #{tpu_custom_call.1} parent=43 // pred_fallthru
          _
      $region44: #{tpu_custom_call.1} parent=5 // pred_fallthru
        _
    $region6: #{tpu_custom_call.1} parent=1 // loop_footer
      %s17 = sadd.s32 1, %s13
    $region7: #{tpu_custom_call.1} parent=1 // loop_footer_branch
      %12 = sbr.rel target = $region3
    $region8: #{tpu_custom_call.1} parent=1 // loop_exit
      _
    %458 = vsyncpa [#allocation3], 1
    %s459 = scalar_lea.sflag [#allocation3], 1
    %460 = vsyncpa %s459, 1
    %461 = vsyncpa [#allocation4], 1
    %s462 = scalar_lea.sflag [#allocation4], 1
    %463 = vsyncpa %s462, 1

</llo_original>
